<compile_context>
chip_gen: v6e
topology: v6e:2x2x1
jax: 0.10.0
libtpu: 0.0.40
codegen_flags: <defaults>
</compile_context>

<pallas_src>
import jax
import jax.numpy as jnp
from jax.experimental import pallas as pl
from jax.experimental.pallas import tpu as pltpu

_LANE = 128
_SUBLANE = 8
# ~8 MiB f32 input block; with input + output double-buffered this is ~32 MiB,
# which fits under the v7x budget (64 MiB physical VMEM) and easily under
# v5e/v6e (128 MiB physical).
_TARGET_ROWS = 128
_TARGET_COLS = 16384


def _block_dim(dim: int, target: int, align: int) -> int:
    """Pick a block extent: full dim if small, else an aligned tile <= target."""
    if dim <= target:
        return dim  # full extent is always a legal block dim
    return max(align, (target // align) * align)


def _vmem_limit_bytes() -> int:
    """Generation-aware scoped-VMEM budget (explicit limit is load-bearing on v5e)."""
    try:
        cap = int(pltpu.get_tpu_info().vmem_capacity_bytes)
    except Exception:
        cap = 64 * 1024 * 1024  # conservative fallback (v7x per-TC physical size)
    # ~3/4 of physical VMEM, floor 32 MiB, cap 96 MiB:
    #   v5e/v6e (128 MiB phys) -> 96 MiB; v7x (64 MiB phys) -> 48 MiB.
    return int(min(max(cap * 3 // 4, 32 * 1024 * 1024), 96 * 1024 * 1024))


def _normalize_kernel(x_ref, sb_ref, o_ref):
    # x_ref:  (br, bc) input tile
    # sb_ref: (br, 2)  per-row (scale, bias) with scale = 1/std, bias = -mean/std
    x = x_ref[...].astype(jnp.float32)
    sb = sb_ref[...]
    scale = sb[:, 0:1]
    bias = sb[:, 1:2]
    o_ref[...] = (x * scale + bias).astype(o_ref.dtype)


def normalize(x: jax.Array, mean, std, *, out_dtype=None, donate_input: bool = False) -> jax.Array:
    """(x - mean[c]) / std[c] for NCHW input x.

    out_dtype: optional override (e.g. jnp.bfloat16 for uint8 inputs to cut HBM
               writeback traffic). Default: keep floating dtype, promote
               integer inputs to float32 (matches torchvision semantics).
    donate_input: if True and the output dtype matches the input dtype, alias
               the output onto the input buffer (no second full-size HBM alloc).
    """
    N, C, H, W = x.shape
    mean = jnp.asarray(mean, dtype=jnp.float32)
    std = jnp.asarray(std, dtype=jnp.float32)
    assert mean.shape == (C,) and std.shape == (C,)

    if out_dtype is None:
        out_dtype = x.dtype if jnp.issubdtype(x.dtype, jnp.floating) else jnp.float32
    out_dtype = jnp.dtype(out_dtype)

    rows, cols = N * C, H * W
    x2d = x.reshape(rows, cols)  # contiguous row-major view: lane-dense last dim

    # Fused per-row affine params (row r of x2d is channel r % C).
    scale = 1.0 / std
    bias = -mean * scale
    sb = jnp.stack([jnp.tile(scale, N), jnp.tile(bias, N)], axis=-1)  # (rows, 2) f32

    br = _block_dim(rows, _TARGET_ROWS, _SUBLANE)
    bc = _block_dim(cols, _TARGET_COLS, _LANE)
    grid = (pl.cdiv(rows, br), pl.cdiv(cols, bc))

    # v7x megacore: make sure a large input does not collapse to a 1-step grid
    # (one TensorCore would sit idle). Tiny inputs stay single-step.
    total_bytes = rows * cols * x2d.dtype.itemsize
    if grid == (1, 1) and total_bytes >= (1 << 20):
        if rows >= 2 * _SUBLANE:
            half = (rows + 1) // 2
            br = ((half + _SUBLANE - 1) // _SUBLANE) * _SUBLANE
        elif cols >= 2 * _LANE:
            half = (cols + 1) // 2
            bc = ((half + _LANE - 1) // _LANE) * _LANE
        grid = (pl.cdiv(rows, br), pl.cdiv(cols, bc))

    extra_kwargs = {}
    if donate_input and out_dtype == x2d.dtype:
        # TODO(synk): `inplace=True` has no meaning under JAX's functional
        # arrays; aliasing the output onto the (donated) input is the closest
        # equivalent and merely reuses the HBM buffer.
        extra_kwargs["input_output_aliases"] = {0: 0}

    out2d = pl.pallas_call(
        _normalize_kernel,
        out_shape=jax.ShapeDtypeStruct((rows, cols), out_dtype),
        grid=grid,
        in_specs=[
            pl.BlockSpec((br, bc), lambda i, j: (i, j)),
            pl.BlockSpec((br, 2), lambda i, j: (i, 0)),
        ],
        out_specs=pl.BlockSpec((br, bc), lambda i, j: (i, j)),
        compiler_params=pltpu.CompilerParams(
            dimension_semantics=("parallel", "parallel"),
            vmem_limit_bytes=_vmem_limit_bytes(),
        ),
        **extra_kwargs,
    )(x2d, sb)

    return out2d.reshape(N, C, H, W)


if __name__ == "__main__":
    key = jax.random.PRNGKey(0)
    N, C, H, W = 2, 4, 16, 16
    x = jax.random.normal(key, (N, C, H, W), dtype=jnp.float32)

    # Deterministic per-channel parameters, as the module's __init__ would get.
    mean = jnp.array([0.485, 0.456, 0.406, 0.5], dtype=jnp.float32)
    std = jnp.array([0.229, 0.224, 0.225, 0.25], dtype=jnp.float32)

    out = normalize(x, mean, std)
    out = jax.block_until_ready(out)

    # Reference (mirrors torchvision F.normalize semantics).
    ref = (x - mean[None, :, None, None]) / std[None, :, None, None]
    assert out.shape == x.shape and out.dtype == x.dtype
    assert jnp.allclose(out, ref, atol=1e-5, rtol=1e-5)

    print("KERNEL_OK")
</pallas_src>

<mosaic_0001>
module attributes {stable_mosaic.version = 11 : i64} {
  func.func @_normalize_kernel(%arg0: i32, %arg1: i32, %arg2: memref<8x256xf32, #tpu.memory_space<vmem>>, %arg3: memref<8x2xf32, #tpu.memory_space<vmem>>, %arg4: memref<8x256xf32, #tpu.memory_space<vmem>>) attributes {dimension_semantics = [#tpu.dimension_semantics<parallel>, #tpu.dimension_semantics<parallel>], iteration_bounds = array<i64: 1, 1>, scalar_prefetch = 0 : i64, scratch_operands = 0 : i64, tpu.core_type = #tpu.core_type<tc>, window_params = [{transform_indices = @transform_0, window_bounds = array<i64: 8, 256>}, {transform_indices = @transform_1, window_bounds = array<i64: 8, 2>}, {transform_indices = @transform_2, window_bounds = array<i64: 8, 256>}]} {
    %c0 = arith.constant 0 : index
    %c0_0 = arith.constant 0 : index
    %0 = vector.load %arg2[%c0, %c0_0] : memref<8x256xf32, #tpu.memory_space<vmem>>, vector<8x256xf32>
    %c0_1 = arith.constant 0 : index
    %c0_2 = arith.constant 0 : index
    %1 = vector.load %arg3[%c0_1, %c0_2] : memref<8x2xf32, #tpu.memory_space<vmem>>, vector<8x2xf32>
    %2 = vector.extract_strided_slice %1 {offsets = [0, 0], sizes = [8, 1], strides = [1, 1]} : vector<8x2xf32> to vector<8x1xf32>
    %3 = vector.extract_strided_slice %1 {offsets = [0, 1], sizes = [8, 1], strides = [1, 1]} : vector<8x2xf32> to vector<8x1xf32>
    %4 = vector.broadcast %2 : vector<8x1xf32> to vector<8x256xf32>
    %5 = arith.mulf %0, %4 : vector<8x256xf32>
    %6 = vector.broadcast %3 : vector<8x1xf32> to vector<8x256xf32>
    %7 = arith.addf %5, %6 : vector<8x256xf32>
    %c0_3 = arith.constant 0 : index
    %c0_4 = arith.constant 0 : index
    %8 = vector.load %arg4[%c0_3, %c0_4] : memref<8x256xf32, #tpu.memory_space<vmem>>, vector<8x256xf32>
    tpu.vector_store %arg4[%c0_3, %c0_4], %7 {strides = array<i32>} : memref<8x256xf32, #tpu.memory_space<vmem>>, vector<8x256xf32>,
    return
  }
  func.func @transform_0(%arg0: i32, %arg1: i32) -> (i32, i32) {
    %c0_i32 = arith.constant 0 : i32
    return %arg0, %arg1 : i32, i32
  }
  func.func @transform_1(%arg0: i32, %arg1: i32) -> (i32, i32) {
    %c0_i32 = arith.constant 0 : i32
    %c0_i32_0 = arith.constant 0 : i32
    return %arg0, %c0_i32 : i32, i32
  }
  func.func @transform_2(%arg0: i32, %arg1: i32) -> (i32, i32) {
    %c0_i32 = arith.constant 0 : i32
    return %arg0, %arg1 : i32, i32
  }
}

</mosaic_0001>

<llo_original>
// kernel: tpu_custom_call.1
$region0: #{tpu_custom_call.1}
  #allocation0 [shape = 'u32[]', space=smem, size = 0x4, offset = 0x4, fixed_abs, tag = 'smem constant byte address 0x4 - core index']
  #allocation1 [shape = 'u32[144,128]{1,0:T(1,128)}', space=vmem, size = 0x12000, scoped, tag = 'internal scratch']
  %s0 = inlined_call_operand.hbm [shape: f32[8,256], index: 0, kind: input, shape index: {}]
  %s1 = inlined_call_operand.vmem [shape: f32[8,2], index: 1, kind: input, shape index: {}]
  %s2 = inlined_call_operand.hbm [shape: f32[8,256], index: 2, kind: output, shape index: {}]
  %s3 = sld [smem:[#allocation0]]
  $region22: #{tpu_custom_call.1} parent=0
    _
  %s5 = ssub.s32 1, %s3
  %s6 = scalar_select 0, %s5, %s3
  $region1: #{tpu_custom_call.1} parent=0
    #allocation2 [shape = 'u8[8192]{0}', space=vmem, size = 0x2000, scoped, tag = 'input window, operand 0, single buffered']
    #allocation3 [shape = 's32[1]{0}', space=sflag, size = 0x4, scoped, tag = 'scoped memory for tpu_custom_call.1']
    #allocation4 [shape = 's32[1]{0}', space=sflag, size = 0x4, scoped, tag = 'scoped memory for tpu_custom_call.1']
    #allocation5 [shape = 'u8[8192]{0}', space=vmem, size = 0x2000, scoped, tag = 'output window, operand 0, single buffered']
    %7 = vsyncpa [#allocation3], 0
    %8 = vsyncpa [#allocation4], 0
    // Predicated region
    $region2: #{tpu_custom_call.1} parent=1 // pred_check
      _
    $region3: #{tpu_custom_call.1} parent=1 // pred_check_branch
      %10 = sbr.rel (0) target = $region5
    $region4: #{tpu_custom_call.1} parent=1 // pred_region
      %s12 = ssub.s32 256, 256
      %13 = vsyncadd [#allocation3], %s12
      %s15 = sshll.u32 [#allocation2], 4
      %s16 = int_to_ptr.vmem [resolvable:$true] %s15
      %18 = dma.hbm_to_vmem [thread:$0]  %s0, 256, %s16, [#allocation3]
    $region5: #{tpu_custom_call.1} parent=1 // pred_fallthru
      _
    // Predicated region
    $region6: #{tpu_custom_call.1} parent=1 // pred_check
      _
    $region7: #{tpu_custom_call.1} parent=1 // pred_check_branch
      %20 = sbr.rel (0) target = $region9
    $region8: #{tpu_custom_call.1} parent=1 // pred_region
      _
    $region9: #{tpu_custom_call.1} parent=1 // pred_fallthru
      _
    // Predicated region
    $region10: #{tpu_custom_call.1} parent=1 // pred_check
      _
    $region11: #{tpu_custom_call.1} parent=1 // pred_check_branch
      %22 = sbr.rel (0) target = $region13
    $region12: #{tpu_custom_call.1} parent=1 // pred_region
      %23 = dma.done [#allocation3], 256
    $region13: #{tpu_custom_call.1} parent=1 // pred_fallthru
      _
    %v24 = vld [vmem:[#allocation2] sm:$0xff]
    %v25 = vld [vmem:[#allocation2 + $0x8] sm:$0xff]
    %v26 = vld [vmem:[%s1] sm:$0xff]
    %28 = vset.pattern.permute.xlu0 0
    %29 = vperm.xlu0 %28, %v26
    %v30 = vpop.permute.xlu0 %29
    %v32 = vmul.f32 %v24, %v30
    %v33 = vmul.f32 %v25, %v30
    %34 = vset.pattern.permute.xlu0 1
    %35 = vperm.xlu0 %34, %v26
    %v36 = vpop.permute.xlu0 %35
    %v38 = vadd.f32 %v32, %v36
    %v39 = vadd.f32 %v33, %v36
    %40 = vst [vmem:[#allocation5] sm:$0xff] %v38
    %41 = vst [vmem:[#allocation5 + $0x8] sm:$0xff] %v39
    // Predicated region
    $region14: #{tpu_custom_call.1} parent=1 // pred_check
      _
    $region15: #{tpu_custom_call.1} parent=1 // pred_check_branch
      %43 = sbr.rel (0) target = $region17
    $region16: #{tpu_custom_call.1} parent=1 // pred_region
      %s45 = ssub.s32 256, 256
      %46 = vsyncadd [#allocation4], %s45
      %s48 = sshll.u32 [#allocation5], 4
      %s49 = int_to_ptr.vmem [resolvable:$true] %s48
      %51 = dma.vmem_to_hbm [thread:$0]  %s49, 256, %s2, [#allocation4]
    $region17: #{tpu_custom_call.1} parent=1 // pred_fallthru
      _
    // Predicated region
    $region18: #{tpu_custom_call.1} parent=1 // pred_check
      _
    $region19: #{tpu_custom_call.1} parent=1 // pred_check_branch
      %53 = sbr.rel (0) target = $region21
    $region20: #{tpu_custom_call.1} parent=1 // pred_region
      %54 = dma.done [#allocation4], 256
    $region21: #{tpu_custom_call.1} parent=1 // pred_fallthru
      _
    %55 = vsyncpa [#allocation3], 1
    %56 = vsyncpa [#allocation4], 1

</llo_original>
